<compile_context>
chip_gen: v7x
topology: tpu7x:2x2x1
jax: 0.10.0
libtpu: 0.0.40
codegen_flags: <defaults>
</compile_context>

<pallas_src>
import functools

import jax
import jax.numpy as jnp
from jax.experimental import pallas as pl
from jax.experimental.pallas import tpu as pltpu

_LANE = 128


def _round_up(x: int, m: int) -> int:
    return ((x + m - 1) // m) * m


def embedding_net_kernel(x_ref, w1_ref, b1_ref, w2_ref, b2_ref,
                         emb_ref, outz_ref):
    # In-kernel cast f32 -> bf16 (VPU), so HBM only ever sees the f32 input once.
    x = x_ref[...].astype(w1_ref.dtype)                         # [TM, res] bf16

    # fc1 + ReLU  (MXU matmul, f32 accumulation; epilogue in f32)
    h = jnp.dot(x, w1_ref[...], preferred_element_type=jnp.float32)
    h = h + b1_ref[...]                                         # bias [1, E] broadcast
    emb = jnp.maximum(h, 0.0)                                   # ReLU, f32
    emb_ref[...] = emb.astype(emb_ref.dtype)

    # fc2 + L2 normalize along dim=1.  W2/b2 are zero-padded to 128 output
    # columns, so the padded z columns are exactly 0 and do not change ||z||.
    z = jnp.dot(emb.astype(w2_ref.dtype), w2_ref[...],
                preferred_element_type=jnp.float32)
    z = z + b2_ref[...]                                         # [TM, O_pad], f32
    ss = jnp.sum(z * z, axis=1, keepdims=True)                  # [TM, 1]
    # 1 / max(||z||, 1e-12) == rsqrt(max(ss, 1e-24)); rsqrt runs on the EUP.
    inv = jax.lax.rsqrt(jnp.maximum(ss, 1e-24))
    outz_ref[...] = (z * inv).astype(outz_ref.dtype)


def prepare_params(w1, b1, w2, b2, compute_dtype=jnp.bfloat16):
    """One-time param prep (call OUTSIDE the forward hot path).

    w1: [res, E], w2: [E, O]  (already transposed from torch's [out, in]).
    Casts weights to the MXU compute dtype and lane-pads fc2 to 128 columns.
    """
    out_size = w2.shape[1]
    o_pad = _round_up(out_size, _LANE)
    w1c = jnp.asarray(w1, compute_dtype)
    w2c = jnp.pad(jnp.asarray(w2, compute_dtype), ((0, 0), (0, o_pad - out_size)))
    b1r = jnp.asarray(b1, jnp.float32).reshape(1, -1)
    b2r = jnp.pad(jnp.asarray(b2, jnp.float32), (0, o_pad - out_size)).reshape(1, -1)
    return w1c, b1r, w2c, b2r


def _choose_tm(B, tm, res_size, embed_size, outz_pad, in_itm, out_itm, w_bytes):
    """Pick the batch tile: big tiles, >=2 balanced steps when possible (v7x
    has two TensorCores), with a conservative VMEM cap (v7x: 64 MiB physical,
    32 MiB scoped default)."""
    if tm is None:
        tm = B if B <= 16 else min(512, _round_up(pl.cdiv(B, 2), 8))
    tm = max(8, min(tm, B))
    # Double-buffered streaming tiles (x, emb, out_z) must fit alongside the
    # (double-buffered) resident weights within a conservative 24 MiB budget.
    per_row = 2 * (res_size * in_itm + embed_size * out_itm + outz_pad * out_itm)
    budget = (24 << 20) - 2 * w_bytes
    tm = min(tm, max(8, budget // per_row))
    if tm >= B:
        return B
    tm = _round_up(tm, 8)
    return B if tm >= B else tm


@functools.partial(jax.jit, static_argnames=("outz_size", "tm"))
def embedding_net_forward(features, w1c, b1r, w2c, b2r, *, outz_size, tm=None):
    """features: [B, res] (f32); w1c: [res, E] bf16; b1r: [1, E] f32;
    w2c: [E, O_pad] bf16 (zero-padded); b2r: [1, O_pad] f32."""
    B, res_size = features.shape
    embed_size = w1c.shape[1]
    outz_pad = w2c.shape[1]
    out_dtype = features.dtype

    in_itm = jnp.dtype(features.dtype).itemsize
    w_itm = jnp.dtype(w1c.dtype).itemsize
    out_itm = jnp.dtype(out_dtype).itemsize
    w_bytes = (w1c.size + w2c.size) * w_itm + (b1r.size + b2r.size) * 4

    tm = _choose_tm(B, tm, res_size, embed_size, outz_pad,
                    in_itm, out_itm, w_bytes)
    grid = (pl.cdiv(B, tm),)

    flops = 2 * B * (res_size * embed_size + embed_size * outz_pad)
    bytes_accessed = (B * res_size * in_itm + w_bytes
                      + B * embed_size * out_itm + B * outz_pad * out_itm)

    emb, outz = pl.pallas_call(
        embedding_net_kernel,
        grid=grid,
        out_shape=(
            jax.ShapeDtypeStruct((B, embed_size), out_dtype),
            jax.ShapeDtypeStruct((B, outz_pad), out_dtype),
        ),
        in_specs=[
            # streaming batch tile of f32 activations (ragged edge masked by Pallas)
            pl.BlockSpec((tm, res_size), lambda i: (i, 0)),
            # weights / biases: constant block index -> resident in VMEM
            pl.BlockSpec((res_size, embed_size), lambda i: (0, 0)),
            pl.BlockSpec((1, embed_size), lambda i: (0, 0)),
            pl.BlockSpec((embed_size, outz_pad), lambda i: (0, 0)),
            pl.BlockSpec((1, outz_pad), lambda i: (0, 0)),
        ],
        out_specs=(
            pl.BlockSpec((tm, embed_size), lambda i: (i, 0)),
            pl.BlockSpec((tm, outz_pad), lambda i: (i, 0)),   # lane-dense (128)
        ),
        compiler_params=pltpu.CompilerParams(
            dimension_semantics=("parallel",)),
        cost_estimate=pl.CostEstimate(
            flops=flops,
            transcendentals=B,                 # one rsqrt per row
            bytes_accessed=bytes_accessed),
    )(features, w1c, b1r, w2c, b2r)

    return emb, outz[:, :outz_size]


def _reference(features, w1, b1, w2, b2, compute_dtype=jnp.bfloat16):
    """Pure-JAX reference with the same bf16-matmul / f32-epilogue policy."""
    xc = features.astype(compute_dtype)
    h = jnp.dot(xc, w1.astype(compute_dtype),
                preferred_element_type=jnp.float32) + b1
    emb = jnp.maximum(h, 0.0)
    z = jnp.dot(emb.astype(compute_dtype), w2.astype(compute_dtype),
                preferred_element_type=jnp.float32) + b2
    inv = jax.lax.rsqrt(jnp.maximum(
        jnp.sum(z * z, axis=1, keepdims=True), 1e-24))
    return emb, z * inv


if __name__ == "__main__":
    # Shapes consistent with the module: opt.resSize=256, opt.embedSize=128,
    # opt.outzSize=64, batch=100 (exercises the ragged edge block and the
    # lane-padded out_z path).
    B, res_size, embed_size, outz_size = 100, 256, 128, 64

    key = jax.random.PRNGKey(0)
    kx, kw1, kw2 = jax.random.split(key, 3)

    features = jax.random.normal(kx, (B, res_size), dtype=jnp.float32)

    # weights_init: Linear.weight ~ N(0, 0.02), bias = 0.
    # Stored pre-transposed as [in, out] for the x @ W layout.
    w1 = 0.02 * jax.random.normal(kw1, (res_size, embed_size), dtype=jnp.float32)
    b1 = jnp.zeros((embed_size,), dtype=jnp.float32)
    w2 = 0.02 * jax.random.normal(kw2, (embed_size, outz_size), dtype=jnp.float32)
    b2 = jnp.zeros((outz_size,), dtype=jnp.float32)

    # One-time param prep outside the forward path (cast + lane-pad fc2).
    params = prepare_params(w1, b1, w2, b2)

    embedding, out_z = embedding_net_forward(features, *params,
                                             outz_size=outz_size)
    jax.block_until_ready((embedding, out_z))
    assert embedding.shape == (B, embed_size)
    assert out_z.shape == (B, outz_size)

    # Check against a pure-JAX reference with the identical bf16/f32 policy.
    emb_ref, outz_ref = _reference(features, w1, b1, w2, b2)
    assert jnp.allclose(embedding, emb_ref, atol=1e-4, rtol=1e-3), "embedding mismatch"
    assert jnp.allclose(out_z, outz_ref, atol=1e-4, rtol=1e-3), "out_z mismatch"

    # Sanity check against the full-f32 PyTorch-style math (bf16 rounding only).
    emb_f32 = jnp.maximum(features @ w1 + b1, 0.0)
    z_f32 = emb_f32 @ w2 + b2
    outz_f32 = z_f32 / jnp.maximum(
        jnp.sqrt(jnp.sum(z_f32 * z_f32, axis=1, keepdims=True)), 1e-12)
    assert jnp.allclose(embedding, emb_f32, atol=3e-2, rtol=3e-2)
    assert jnp.allclose(out_z, outz_f32, atol=3e-2, rtol=3e-2)

    print("KERNEL_OK")
</pallas_src>

<mosaic_0001>
module attributes {stable_mosaic.version = 11 : i64} {
  func.func @embedding_net_kernel(%arg0: i32, %arg1: memref<56x256xf32, #tpu.memory_space<vmem>>, %arg2: memref<256x128xbf16, #tpu.memory_space<vmem>>, %arg3: memref<1x128xf32, #tpu.memory_space<vmem>>, %arg4: memref<128x128xbf16, #tpu.memory_space<vmem>>, %arg5: memref<1x128xf32, #tpu.memory_space<vmem>>, %arg6: memref<56x128xf32, #tpu.memory_space<vmem>>, %arg7: memref<56x128xf32, #tpu.memory_space<vmem>>) attributes {dimension_semantics = [#tpu.dimension_semantics<parallel>], iteration_bounds = array<i64: 2>, scalar_prefetch = 0 : i64, scratch_operands = 0 : i64, tpu.core_type = #tpu.core_type<tc>, window_params = [{transform_indices = @transform_0, window_bounds = array<i64: 56, 256>}, {pipeline_mode = #tpu.pipeline_mode<synchronous>, transform_indices = @transform_1, window_bounds = array<i64: 256, 128>}, {pipeline_mode = #tpu.pipeline_mode<synchronous>, transform_indices = @transform_2, window_bounds = array<i64: 1, 128>}, {pipeline_mode = #tpu.pipeline_mode<synchronous>, transform_indices = @transform_3, window_bounds = array<i64: 128, 128>}, {pipeline_mode = #tpu.pipeline_mode<synchronous>, transform_indices = @transform_4, window_bounds = array<i64: 1, 128>}, {transform_indices = @transform_5, window_bounds = array<i64: 56, 128>}, {transform_indices = @transform_6, window_bounds = array<i64: 56, 128>}]} {
    %c0 = arith.constant 0 : index
    %c0_0 = arith.constant 0 : index
    %0 = vector.load %arg1[%c0, %c0_0] : memref<56x256xf32, #tpu.memory_space<vmem>>, vector<56x256xf32>
    %1 = arith.truncf %0 : vector<56x256xf32> to vector<56x256xbf16>
    %c0_1 = arith.constant 0 : index
    %c0_2 = arith.constant 0 : index
    %2 = vector.load %arg2[%c0_1, %c0_2] : memref<256x128xbf16, #tpu.memory_space<vmem>>, vector<256x128xbf16>
    %cst = arith.constant dense<0.000000e+00> : vector<56x128xf32>
    %3 = tpu.matmul %1, %2, %cst {dimension_numbers = #tpu.dot_dimension_numbers<[1], [0], [0], [1], [0, 0, 1, 1], [], []>} : vector<56x256xbf16>, vector<256x128xbf16>, vector<56x128xf32> -> vector<56x128xf32>
    %c0_3 = arith.constant 0 : index
    %c0_4 = arith.constant 0 : index
    %4 = vector.load %arg3[%c0_3, %c0_4] : memref<1x128xf32, #tpu.memory_space<vmem>>, vector<1x128xf32>
    %5 = vector.broadcast %4 : vector<1x128xf32> to vector<56x128xf32>
    %6 = arith.addf %3, %5 : vector<56x128xf32>
    %cst_5 = arith.constant 0.000000e+00 : f32
    %7 = vector.broadcast %cst_5 : f32 to vector<56x128xf32>
    %8 = arith.maximumf %6, %7 : vector<56x128xf32>
    %c0_6 = arith.constant 0 : index
    %c0_7 = arith.constant 0 : index
    %9 = vector.load %arg6[%c0_6, %c0_7] : memref<56x128xf32, #tpu.memory_space<vmem>>, vector<56x128xf32>
    tpu.vector_store %arg6[%c0_6, %c0_7], %8 {strides = array<i32>} : memref<56x128xf32, #tpu.memory_space<vmem>>, vector<56x128xf32>,
    %10 = arith.truncf %8 : vector<56x128xf32> to vector<56x128xbf16>
    %c0_8 = arith.constant 0 : index
    %c0_9 = arith.constant 0 : index
    %11 = vector.load %arg4[%c0_8, %c0_9] : memref<128x128xbf16, #tpu.memory_space<vmem>>, vector<128x128xbf16>
    %cst_10 = arith.constant dense<0.000000e+00> : vector<56x128xf32>
    %12 = tpu.matmul %10, %11, %cst_10 {dimension_numbers = #tpu.dot_dimension_numbers<[1], [0], [0], [1], [0, 0, 1, 1], [], []>} : vector<56x128xbf16>, vector<128x128xbf16>, vector<56x128xf32> -> vector<56x128xf32>
    %c0_11 = arith.constant 0 : index
    %c0_12 = arith.constant 0 : index
    %13 = vector.load %arg5[%c0_11, %c0_12] : memref<1x128xf32, #tpu.memory_space<vmem>>, vector<1x128xf32>
    %14 = vector.broadcast %13 : vector<1x128xf32> to vector<56x128xf32>
    %15 = arith.addf %12, %14 : vector<56x128xf32>
    %16 = arith.mulf %15, %15 : vector<56x128xf32>
    %cst_13 = arith.constant dense<0.000000e+00> : vector<56xf32>
    %17 = vector.multi_reduction <add>, %16, %cst_13 [1] : vector<56x128xf32> to vector<56xf32>
    %18 = vector.shape_cast %17 : vector<56xf32> to vector<56x1xf32>
    %cst_14 = arith.constant 1.000000e-24 : f32
    %19 = vector.broadcast %cst_14 : f32 to vector<56x1xf32>
    %20 = arith.maximumf %18, %19 : vector<56x1xf32>
    %21 = math.rsqrt %20 : vector<56x1xf32>
    %22 = vector.broadcast %21 : vector<56x1xf32> to vector<56x128xf32>
    %23 = arith.mulf %15, %22 : vector<56x128xf32>
    %c0_15 = arith.constant 0 : index
    %c0_16 = arith.constant 0 : index
    %24 = vector.load %arg7[%c0_15, %c0_16] : memref<56x128xf32, #tpu.memory_space<vmem>>, vector<56x128xf32>
    tpu.vector_store %arg7[%c0_15, %c0_16], %23 {strides = array<i32>} : memref<56x128xf32, #tpu.memory_space<vmem>>, vector<56x128xf32>,
    return
  }
  func.func @transform_0(%arg0: i32) -> (i32, i32) {
    %c0_i32 = arith.constant 0 : i32
    %c0_i32_0 = arith.constant 0 : i32
    return %arg0, %c0_i32 : i32, i32
  }
  func.func @transform_1(%arg0: i32) -> (i32, i32) {
    %c0_i32 = arith.constant 0 : i32
    %c0_i32_0 = arith.constant 0 : i32
    %c0_i32_1 = arith.constant 0 : i32
    return %c0_i32, %c0_i32_0 : i32, i32
  }
  func.func @transform_2(%arg0: i32) -> (i32, i32) {
    %c0_i32 = arith.constant 0 : i32
    %c0_i32_0 = arith.constant 0 : i32
    %c0_i32_1 = arith.constant 0 : i32
    return %c0_i32, %c0_i32_0 : i32, i32
  }
  func.func @transform_3(%arg0: i32) -> (i32, i32) {
    %c0_i32 = arith.constant 0 : i32
    %c0_i32_0 = arith.constant 0 : i32
    %c0_i32_1 = arith.constant 0 : i32
    return %c0_i32, %c0_i32_0 : i32, i32
  }
  func.func @transform_4(%arg0: i32) -> (i32, i32) {
    %c0_i32 = arith.constant 0 : i32
    %c0_i32_0 = arith.constant 0 : i32
    %c0_i32_1 = arith.constant 0 : i32
    return %c0_i32, %c0_i32_0 : i32, i32
  }
  func.func @transform_5(%arg0: i32) -> (i32, i32) {
    %c0_i32 = arith.constant 0 : i32
    %c0_i32_0 = arith.constant 0 : i32
    return %arg0, %c0_i32 : i32, i32
  }
  func.func @transform_6(%arg0: i32) -> (i32, i32) {
    %c0_i32 = arith.constant 0 : i32
    %c0_i32_0 = arith.constant 0 : i32
    return %arg0, %c0_i32 : i32, i32
  }
}

</mosaic_0001>

<llo_original>
// kernel: embedding_net_forward.1
$region0: #{embedding_net_forward.1}
  #allocation0 [shape = 'u32[]', space=smem, size = 0x4, offset = 0x4, fixed_abs, tag = 'smem constant byte address 0x4 - core index']
  #allocation1 [shape = 'u32[144,128]{1,0:T(1,128)}', space=vmem, size = 0x12000, scoped, tag = 'internal scratch']
  %s0 = inlined_call_operand.hbm [shape: f32[100,256], index: 0, kind: input, shape index: {}]
  %s1 = inlined_call_operand.hbm [shape: bf16[256,128], index: 1, kind: input, shape index: {}]
  %s2 = inlined_call_operand.vmem [shape: f32[1,128], index: 2, kind: input, shape index: {}]
  %s3 = inlined_call_operand.hbm [shape: bf16[128,128], index: 3, kind: input, shape index: {}]
  %s4 = inlined_call_operand.vmem [shape: f32[1,128], index: 4, kind: input, shape index: {}]
  %s5 = inlined_call_operand.hbm [shape: f32[100,128], index: 5, kind: output, shape index: {0}]
  %s6 = inlined_call_operand.vmem [shape: f32[100,128], index: 6, kind: output, shape index: {1}]
  %7 = xla_tuple %s5, %s6
  %s8 = sld [smem:[#allocation0]]
  $region121: #{embedding_net_forward.1} parent=0
    _
  %s10 = ssub.s32 1, %s8
  %s11 = scalar_select 0, %s10, %s8
  $region1: #{embedding_net_forward.1} parent=0
    #allocation2 [shape = 'u8[114688]{0}', space=vmem, size = 0x1c000, scoped, tag = 'input window, operand 0']
    #allocation3 [shape = 's32[2]{0}', space=sflag, size = 0x8, scoped, tag = 'scoped memory for embedding_net_forward.1']
    #allocation4 [shape = 's32[2]{0}', space=sflag, size = 0x8, scoped, tag = 'scoped memory for embedding_net_forward.1']
    #allocation5 [shape = 'u8[65536]{0}', space=vmem, size = 0x10000, scoped, tag = 'input window, operand 1, single buffered']
    #allocation6 [shape = 's32[1]{0}', space=sflag, size = 0x4, scoped, tag = 'scoped memory for embedding_net_forward.1']
    #allocation7 [shape = 'u8[32768]{0}', space=vmem, size = 0x8000, scoped, tag = 'input window, operand 3, single buffered']
    #allocation8 [shape = 'u8[57344]{0}', space=vmem, size = 0xe000, scoped, tag = 'output window, operand 0']
    #allocation9 [shape = 'u8[57344]{0}', space=vmem, size = 0xe000, scoped, tag = 'output window, operand 1']
    %12 = vsyncpa [#allocation3], 0
    %s13 = scalar_lea.sflag [#allocation3], 1
    %14 = vsyncpa %s13, 0
    %15 = vsyncpa [#allocation6], 0
    %16 = vsyncpa [#allocation4], 0
    %s17 = scalar_lea.sflag [#allocation4], 1
    %18 = vsyncpa %s17, 0
    loop: start=0, step=1, limit=4
    $region2: #{embedding_net_forward.1} parent=1 // loop_pre_header
      _
    $region3: #{embedding_net_forward.1} parent=1 // loop_header
      %s20 = sphi 0, %s24
      %p21 = scmp.ge.s32.totalorder %s20, 4
      %s30 = sphi 0, %s32
      %s33 = sphi 0, %s30
      %s34 = sphi 0, %s33
      %s50 = sphi 0, %s34
      %s54 = sphi 0, %s54
      %s56 = sphi 0, %s54
      %s57 = sphi 0, %s56
      %s71 = sphi 0, %s57
      %s75 = sphi 0, %s75
      %s77 = sphi 0, %s75
      %s78 = sphi 0, %s77
      %s92 = sphi 0, %s78
      %s96 = sphi 0, %s96
      %s98 = sphi 0, %s96
      %s99 = sphi 0, %s98
      %s113 = sphi 0, %s99
      %s117 = sphi 0, %s117
      %s119 = sphi 0, %s117
      %s120 = sphi 0, %s119
      %s134 = sphi 0, %s120
      %s140 = sphi 0, %s142
      %s143 = sphi 0, %s140
      %s144 = sphi 0, %s143
      %s160 = sphi 0, %s144
      %s166 = sphi 0, %s168
      %s169 = sphi 0, %s166
      %s170 = sphi 0, %s169
      %s186 = sphi 0, %s170
    $region4: #{embedding_net_forward.1} parent=1 // loop_header_branch
      %23 = sbr.rel (%p21) target = $region8
    $region5: #{embedding_net_forward.1} parent=1 // loop_body
      %s25 = ssub.s32 %s20, 1
      %s26 = ssub.s32 %s20, 2
      %s27 = sadd.s32 %s20, 1
      %s28 = ssub.s32 %s20, %s27
      %p29 = scmp.eq.s32.totalorder %s28, 0
      %s31 = sadd.s32 %s30, 1
      %s32 = scalar_select %p29, %s30, %s31
      %p35 = pneg %p29
      %p36 = scmp.eq.s32.totalorder %s20, 1
      %p37 = por %p35, %p36
      %p38 = scmp.ne.s32.totalorder %s30, %s33
      %p39 = scmp.eq.s32.totalorder %s20, 0
      %p40 = por %p38, %p39
      %p41 = scmp.ne.s32.totalorder %s30, %s33
      %p42 = scmp.eq.s32.totalorder %s25, 1
      %p43 = por %p41, %p42
      %p44 = scmp.ne.s32.totalorder %s33, %s34
      %p45 = scmp.eq.s32.totalorder %s25, 0
      %p46 = por %p44, %p45
      %p47 = scmp.ne.s32.totalorder %s33, %s34
      %p48 = scmp.eq.s32.totalorder %s26, 1
      %p49 = por %p47, %p48
      %p51 = scmp.ne.s32.totalorder %s34, %s50
      %p52 = scmp.eq.s32.totalorder %s26, 0
      %p53 = por %p51, %p52
      %s55 = sadd.s32 %s54, 1
      %p58 = scmp.eq.s32.totalorder %s20, 1
      %p59 = scmp.ne.s32.totalorder %s54, %s56
      %p60 = scmp.eq.s32.totalorder %s20, 0
      %p61 = por %p59, %p60
      %p62 = scmp.ne.s32.totalorder %s54, %s56
      %p63 = scmp.eq.s32.totalorder %s25, 1
      %p64 = por %p62, %p63
      %p65 = scmp.ne.s32.totalorder %s56, %s57
      %p66 = scmp.eq.s32.totalorder %s25, 0
      %p67 = por %p65, %p66
      %p68 = scmp.ne.s32.totalorder %s56, %s57
      %p69 = scmp.eq.s32.totalorder %s26, 1
      %p70 = por %p68, %p69
      %p72 = scmp.ne.s32.totalorder %s57, %s71
      %p73 = scmp.eq.s32.totalorder %s26, 0
      %p74 = por %p72, %p73
      %s76 = sadd.s32 %s75, 1
      %p79 = scmp.eq.s32.totalorder %s20, 1
      %p80 = scmp.ne.s32.totalorder %s75, %s77
      %p81 = scmp.eq.s32.totalorder %s20, 0
      %p82 = por %p80, %p81
      %p83 = scmp.ne.s32.totalorder %s75, %s77
      %p84 = scmp.eq.s32.totalorder %s25, 1
      %p85 = por %p83, %p84
      %p86 = scmp.ne.s32.totalorder %s77, %s78
      %p87 = scmp.eq.s32.totalorder %s25, 0
      %p88 = por %p86, %p87
      %p89 = scmp.ne.s32.totalorder %s77, %s78
      %p90 = scmp.eq.s32.totalorder %s26, 1
      %p91 = por %p89, %p90
      %p93 = scmp.ne.s32.totalorder %s78, %s92
      %p94 = scmp.eq.s32.totalorder %s26, 0
      %p95 = por %p93, %p94
      %s97 = sadd.s32 %s96, 1
      %p100 = scmp.eq.s32.totalorder %s20, 1
      %p101 = scmp.ne.s32.totalorder %s96, %s98
      %p102 = scmp.eq.s32.totalorder %s20, 0
      %p103 = por %p101, %p102
      %p104 = scmp.ne.s32.totalorder %s96, %s98
      %p105 = scmp.eq.s32.totalorder %s25, 1
      %p106 = por %p104, %p105
      %p107 = scmp.ne.s32.totalorder %s98, %s99
      %p108 = scmp.eq.s32.totalorder %s25, 0
      %p109 = por %p107, %p108
      %p110 = scmp.ne.s32.totalorder %s98, %s99
      %p111 = scmp.eq.s32.totalorder %s26, 1
      %p112 = por %p110, %p111
      %p114 = scmp.ne.s32.totalorder %s99, %s113
      %p115 = scmp.eq.s32.totalorder %s26, 0
      %p116 = por %p114, %p115
      %s118 = sadd.s32 %s117, 1
      %p121 = scmp.eq.s32.totalorder %s20, 1
      %p122 = scmp.ne.s32.totalorder %s117, %s119
      %p123 = scmp.eq.s32.totalorder %s20, 0
      %p124 = por %p122, %p123
      %p125 = scmp.ne.s32.totalorder %s117, %s119
      %p126 = scmp.eq.s32.totalorder %s25, 1
      %p127 = por %p125, %p126
      %p128 = scmp.ne.s32.totalorder %s119, %s120
      %p129 = scmp.eq.s32.totalorder %s25, 0
      %p130 = por %p128, %p129
      %p131 = scmp.ne.s32.totalorder %s119, %s120
      %p132 = scmp.eq.s32.totalorder %s26, 1
      %p133 = por %p131, %p132
      %p135 = scmp.ne.s32.totalorder %s120, %s134
      %p136 = scmp.eq.s32.totalorder %s26, 0
      %p137 = por %p135, %p136
      %s138 = ssub.s32 %s20, %s27
      %p139 = scmp.eq.s32.totalorder %s138, 0
      %s141 = sadd.s32 %s140, 1
      %s142 = scalar_select %p139, %s140, %s141
      %p145 = pneg %p139
      %p146 = scmp.eq.s32.totalorder %s20, 1
      %p147 = por %p145, %p146
      %p148 = scmp.ne.s32.totalorder %s140, %s143
      %p149 = scmp.eq.s32.totalorder %s20, 0
      %p150 = por %p148, %p149
      %p151 = scmp.ne.s32.totalorder %s140, %s143
      %p152 = scmp.eq.s32.totalorder %s25, 1
      %p153 = por %p151, %p152
      %p154 = scmp.ne.s32.totalorder %s143, %s144
      %p155 = scmp.eq.s32.totalorder %s25, 0
      %p156 = por %p154, %p155
      %p157 = scmp.ne.s32.totalorder %s143, %s144
      %p158 = scmp.eq.s32.totalorder %s26, 1
      %p159 = por %p157, %p158
      %p161 = scmp.ne.s32.totalorder %s144, %s160
      %p162 = scmp.eq.s32.totalorder %s26, 0
      %p163 = por %p161, %p162
      %s164 = ssub.s32 %s20, %s27
      %p165 = scmp.eq.s32.totalorder %s164, 0
      %s167 = sadd.s32 %s166, 1
      %s168 = scalar_select %p165, %s166, %s167
      %p171 = pneg %p165
      %p172 = scmp.eq.s32.totalorder %s20, 1
      %p173 = por %p171, %p172
      %p174 = scmp.ne.s32.totalorder %s166, %s169
      %p175 = scmp.eq.s32.totalorder %s20, 0
      %p176 = por %p174, %p175
      %p177 = scmp.ne.s32.totalorder %s166, %s169
      %p178 = scmp.eq.s32.totalorder %s25, 1
      %p179 = por %p177, %p178
      %p180 = scmp.ne.s32.totalorder %s169, %s170
      %p181 = scmp.eq.s32.totalorder %s25, 0
      %p182 = por %p180, %p181
      %p183 = scmp.ne.s32.totalorder %s169, %s170
      %p184 = scmp.eq.s32.totalorder %s26, 1
      %p185 = por %p183, %p184
      %p187 = scmp.ne.s32.totalorder %s170, %s186
      %p188 = scmp.eq.s32.totalorder %s26, 0
      %p189 = por %p187, %p188
      %p190 = scmp.le.s32.totalorder 1, %s20
      %p191 = scmp.lt.s32.totalorder %s20, 3
      %p192 = pnand %p190, %p191
      %p193 = pneg %p192
      // Predicated region
      $region9: #{embedding_net_forward.1} parent=5 // pred_check
        _
      $region10: #{embedding_net_forward.1} parent=5 // pred_check_branch
        %195 = sbr.rel (%p192) target = $region12
      $region11: #{embedding_net_forward.1} parent=5 // pred_region
        %s196 = ssub.s32 %s20, 1
        // Predicated region
        $region13: #{embedding_net_forward.1} parent=11 // pred_check
          %p197 = pneg %p67
        $region14: #{embedding_net_forward.1} parent=11 // pred_check_branch
          %199 = sbr.rel (%p197) target = $region16
        $region15: #{embedding_net_forward.1} parent=11 // pred_region
          %s201 = ssub.s32 2048, 2048
          %202 = vsyncadd [#allocation6], %s201
          %s203 = sshll.u32 [#allocation5], 4
          %s204 = int_to_ptr.vmem [resolvable:$true] %s203
          %209 = dma.hbm_to_vmem [thread:$0]  %s1, 2048, %s204, [#allocation6], 64, 64, 4
        $region16: #{embedding_net_forward.1} parent=11 // pred_fallthru
          _
        // Predicated region
        $region17: #{embedding_net_forward.1} parent=11 // pred_check
          %p210 = pneg %p88
        $region18: #{embedding_net_forward.1} parent=11 // pred_check_branch
          %212 = sbr.rel (%p210) target = $region20
        $region19: #{embedding_net_forward.1} parent=11 // pred_region
          _
        $region20: #{embedding_net_forward.1} parent=11 // pred_fallthru
          _
        // Predicated region
        $region21: #{embedding_net_forward.1} parent=11 // pred_check
          %p213 = pneg %p109
        $region22: #{embedding_net_forward.1} parent=11 // pred_check_branch
          %215 = sbr.rel (%p213) target = $region24
        $region23: #{embedding_net_forward.1} parent=11 // pred_region
          %s217 = ssub.s32 1024, 1024
          %218 = vsyncadd [#allocation6], %s217
          %s219 = sshll.u32 [#allocation7], 4
          %s220 = int_to_ptr.vmem [resolvable:$true] %s219
          %225 = dma.hbm_to_vmem [thread:$0]  %s3, 1024, %s220, [#allocation6], 64, 64, 4
        $region24: #{embedding_net_forward.1} parent=11 // pred_fallthru
          _
        // Predicated region
        $region25: #{embedding_net_forward.1} parent=11 // pred_check
          %p226 = pneg %p130
        $region26: #{embedding_net_forward.1} parent=11 // pred_check_branch
          %228 = sbr.rel (%p226) target = $region28
        $region27: #{embedding_net_forward.1} parent=11 // pred_region
          _
        $region28: #{embedding_net_forward.1} parent=11 // pred_fallthru
          _
      $region12: #{embedding_net_forward.1} parent=5 // pred_fallthru
        _
      %p229 = scmp.lt.s32.totalorder %s20, 2
      // Predicated region
      $region29: #{embedding_net_forward.1} parent=5 // pred_check
        %p230 = pneg %p229
      $region30: #{embedding_net_forward.1} parent=5 // pred_check_branch
        %232 = sbr.rel (%p230) target = $region32
      $region31: #{embedding_net_forward.1} parent=5 // pred_region
        // Predicated region
        $region33: #{embedding_net_forward.1} parent=31 // pred_check
          %p233 = pneg %p40
        $region34: #{embedding_net_forward.1} parent=31 // pred_check_branch
          %235 = sbr.rel (%p233) target = $region36
        $region35: #{embedding_net_forward.1} parent=31 // pred_region
          %s236 = sand.u32 %s30, 1
          %s237 = scalar_lea.sflag [#allocation3], %s236
          %s238 = sand.u32 %s30, 1
          %s239 = smul.addr %s238, 112
          %s240 = scalar_lea.vmem [#allocation2], %s239
          %s241 = smul.u32 7, %s20
          %s242 = ssub.s32 13, %s241
          %p243 = scmp.lt.s32.totalorder %s242, 7
          %s244 = scalar_select %p243, %s242, 7
          %s245 = smul.u32 128, %s244
          %s246 = smul.u32 %s245, 2
          %s248 = ssub.s32 1792, %s246
          %249 = vsyncadd %s237, %s248
          %p250 = scmp.ne.s32.totalorder 0, %s246
          %s251 = smul.addr %s241, 2
          %s252 = smul.addr %s251, 128
          %s253 = scalar_lea.hbm %s0, %s252
          %s254 = smul.u32 16, %s244
          %s255 = sshll.u32 %s240, 4
          %s256 = int_to_ptr.vmem [resolvable:$true] %s255
          %s257 = sshll.u32 %s254, 4
          %261 = dma.hbm_to_vmem [thread:$0]  (%p250), %s253, %s257, %s256, %s237, 256, 256, 16
        $region36: #{embedding_net_forward.1} parent=31 // pred_fallthru
          _
      $region32: #{embedding_net_forward.1} parent=5 // pred_fallthru
        _
      %p262 = scmp.le.s32.totalorder 1, %s20
      %p263 = scmp.lt.s32.totalorder %s20, 3
      %p264 = pnand %p262, %p263
      %p265 = pneg %p264
      // Predicated region
      $region37: #{embedding_net_forward.1} parent=5 // pred_check
        _
      $region38: #{embedding_net_forward.1} parent=5 // pred_check_branch
        %267 = sbr.rel (%p264) target = $region40
      $region39: #{embedding_net_forward.1} parent=5 // pred_region
        %s268 = ssub.s32 %s20, 1
        %s269 = sand.u32 %s33, 1
        %s270 = scalar_lea.sflag [#allocation3], %s269
        %s271 = sand.u32 %s33, 1
        %s272 = smul.addr %s271, 112
        %s273 = scalar_lea.vmem [#allocation2], %s272
        // Predicated region
        $region41: #{embedding_net_forward.1} parent=39 // pred_check
          %p274 = pneg %p46
        $region42: #{embedding_net_forward.1} parent=39 // pred_check_branch
          %276 = sbr.rel (%p274) target = $region44
        $region43: #{embedding_net_forward.1} parent=39 // pred_region
          %277 = dma.done %s270, 1792
        $region44: #{embedding_net_forward.1} parent=39 // pred_fallthru
          _
        // Predicated region
        $region45: #{embedding_net_forward.1} parent=39 // pred_check
          %p278 = pneg %p67
        $region46: #{embedding_net_forward.1} parent=39 // pred_check_branch
          %280 = sbr.rel (%p278) target = $region48
        $region47: #{embedding_net_forward.1} parent=39 // pred_region
          %281 = dma.done [#allocation6], 2048
        $region48: #{embedding_net_forward.1} parent=39 // pred_fallthru
          _
        // Predicated region
        $region49: #{embedding_net_forward.1} parent=39 // pred_check
          %p282 = pneg %p109
        $region50: #{embedding_net_forward.1} parent=39 // pred_check_branch
          %284 = sbr.rel (%p282) target = $region52
        $region51: #{embedding_net_forward.1} parent=39 // pred_region
          %285 = dma.done [#allocation6], 1024
        $region52: #{embedding_net_forward.1} parent=39 // pred_fallthru
          _
        %s286 = sand.u32 %s33, 1
        %s287 = scalar_lea.sflag [#allocation3], %s286
        %s288 = sand.u32 %s33, 1
        %s289 = smul.addr %s288, 112
        %s290 = scalar_lea.vmem [#allocation2], %s289
        %p291 = pneg %p46
        %p292 = pneg %p43
        %p293 = pneg %p67
        %p294 = pneg %p64
        %p295 = pneg %p88
        %p296 = pneg %p85
        %p297 = pneg %p109
        %p298 = pneg %p106
        %p299 = pneg %p130
        %p300 = pneg %p127
        %p301 = pneg %p156
        %p302 = pneg %p153
        %s303 = sand.u32 %s143, 1
        %s304 = scalar_lea.sflag [#allocation4], %s303
        %s305 = sand.u32 %s143, 1
        %s306 = smul.addr %s305, 56
        %s307 = scalar_lea.vmem [#allocation8], %s306
        %p308 = pneg %p182
        %p309 = pneg %p179
        %s310 = sand.u32 %s169, 1
        %s311 = sand.u32 %s169, 1
        %s312 = smul.addr %s311, 56
        %s313 = scalar_lea.vmem [#allocation9], %s312
        %s314 = smul.u32 7, %s25
        %s315 = ssub.s32 13, %s314
        %p316 = scmp.lt.s32.totalorder %s315, 7
        %s317 = scalar_select %p316, %s315, 7
        %s318 = smul.u32 128, %s317
        %s319 = smul.u32 %s318, 2
        %s320 = smul.u32 7, %s25
        %s321 = ssub.s32 13, %s320
        %p322 = scmp.lt.s32.totalorder %s321, 7
        %s323 = scalar_select %p322, %s321, 7
        %s324 = smul.u32 128, %s323
        %s325 = smul.u32 7, %s25
        %s326 = ssub.s32 13, %s325
        %p327 = scmp.lt.s32.totalorder %s326, 7
        %s328 = scalar_select %p327, %s326, 7
        %s329 = smul.u32 128, %s328
        %v331 = vld [vmem:[%s273] sm:$0xff]
        %v332 = vld [vmem:[%s273 + $0x8] sm:$0xff]
        %v333 = vld [vmem:[%s273 + $0x10] sm:$0xff]
        %v334 = vld [vmem:[%s273 + $0x18] sm:$0xff]
        %v335 = vld [vmem:[%s273 + $0x20] sm:$0xff]
        %v336 = vld [vmem:[%s273 + $0x28] sm:$0xff]
        %v337 = vld [vmem:[%s273 + $0x30] sm:$0xff]
        %v338 = vld [vmem:[%s273 + $0x38] sm:$0xff]
        %v339 = vld [vmem:[%s273 + $0x40] sm:$0xff]
        %v340 = vld [vmem:[%s273 + $0x48] sm:$0xff]
        %v341 = vld [vmem:[%s273 + $0x50] sm:$0xff]
        %v342 = vld [vmem:[%s273 + $0x58] sm:$0xff]
        %v343 = vld [vmem:[%s273 + $0x60] sm:$0xff]
        %v344 = vld [vmem:[%s273 + $0x68] sm:$0xff]
        %v345 = vpack.c.bf16 %v333, %v331
        %v346 = vpack.c.bf16 %v334, %v332
        %v347 = vpack.c.bf16 %v337, %v335
        %v348 = vpack.c.bf16 %v338, %v336
        %v349 = vpack.c.bf16 %v341, %v339
        %v350 = vpack.c.bf16 %v342, %v340
        %v351 = vpack.c.bf16 %v343, %v343
        %v352 = vpack.c.bf16 %v344, %v344
        %v353 = vld [vmem:[#allocation5] sm:$0xf]
        %v354 = vld [vmem:[#allocation5 + $0x4] sm:$0xf]
        %v355 = vld [vmem:[#allocation5 + $0x8] sm:$0xf]
        %v356 = vld [vmem:[#allocation5 + $0xc] sm:$0xf]
        %v357 = vld [vmem:[#allocation5 + $0x10] sm:$0xf]
        %v358 = vld [vmem:[#allocation5 + $0x14] sm:$0xf]
        %v359 = vld [vmem:[#allocation5 + $0x18] sm:$0xf]
        %v360 = vld [vmem:[#allocation5 + $0x1c] sm:$0xf]
        %v361 = vld [vmem:[#allocation5 + $0x20] sm:$0xf]
        %v362 = vld [vmem:[#allocation5 + $0x24] sm:$0xf]
        %v363 = vld [vmem:[#allocation5 + $0x28] sm:$0xf]
        %v364 = vld [vmem:[#allocation5 + $0x2c] sm:$0xf]
        %v365 = vld [vmem:[#allocation5 + $0x30] sm:$0xf]
        %v366 = vld [vmem:[#allocation5 + $0x34] sm:$0xf]
        %v367 = vld [vmem:[#allocation5 + $0x38] sm:$0xf]
        %v368 = vld [vmem:[#allocation5 + $0x3c] sm:$0xf]
        %v369 = vld [vmem:[#allocation5 + $0x40] sm:$0xf]
        %v370 = vld [vmem:[#allocation5 + $0x44] sm:$0xf]
        %v371 = vld [vmem:[#allocation5 + $0x48] sm:$0xf]
        %v372 = vld [vmem:[#allocation5 + $0x4c] sm:$0xf]
        %v373 = vld [vmem:[#allocation5 + $0x50] sm:$0xf]
        %v374 = vld [vmem:[#allocation5 + $0x54] sm:$0xf]
        %v375 = vld [vmem:[#allocation5 + $0x58] sm:$0xf]
        %v376 = vld [vmem:[#allocation5 + $0x5c] sm:$0xf]
        %v377 = vld [vmem:[#allocation5 + $0x60] sm:$0xf]
        %v378 = vld [vmem:[#allocation5 + $0x64] sm:$0xf]
        %v379 = vld [vmem:[#allocation5 + $0x68] sm:$0xf]
        %v380 = vld [vmem:[#allocation5 + $0x6c] sm:$0xf]
        %v381 = vld [vmem:[#allocation5 + $0x70] sm:$0xf]
        %v382 = vld [vmem:[#allocation5 + $0x74] sm:$0xf]
        %v383 = vld [vmem:[#allocation5 + $0x78] sm:$0xf]
        %v384 = vld [vmem:[#allocation5 + $0x7c] sm:$0xf]
        %v385 = vld [vmem:[%s2] sm:$0x1]
        %v387 = vlaneseq
        %v388 = vshrl.u32 %v387, 7
        %v389 = vsub.s32 0, %v388
        %v390 = vrot.slane %v385, %v389
        %v424 = vunpack.c.l.b16 %v353
        %v425 = vunpack.c.l.b16 %v354
        %v426 = vunpack.c.l.b16 %v355
        %v427 = vunpack.c.l.b16 %v356
        %v428 = vunpack.c.l.b16 %v357
        %v429 = vunpack.c.l.b16 %v358
        %v430 = vunpack.c.l.b16 %v359
        %v431 = vunpack.c.l.b16 %v360
        %v432 = vunpack.c.l.b16 %v361
        %v433 = vunpack.c.l.b16 %v362
        %v434 = vunpack.c.l.b16 %v363
        %v435 = vunpack.c.l.b16 %v364
        %v436 = vunpack.c.l.b16 %v365
        %v437 = vunpack.c.l.b16 %v366
        %v438 = vunpack.c.l.b16 %v367
        %v439 = vunpack.c.l.b16 %v368
        %v440 = vunpack.c.l.b16 %v369
        %v441 = vunpack.c.l.b16 %v370
        %v442 = vunpack.c.l.b16 %v371
        %v443 = vunpack.c.l.b16 %v372
        %v444 = vunpack.c.l.b16 %v373
        %v445 = vunpack.c.l.b16 %v374
        %v446 = vunpack.c.l.b16 %v375
        %v447 = vunpack.c.l.b16 %v376
        %v448 = vunpack.c.l.b16 %v377
        %v449 = vunpack.c.l.b16 %v378
        %v450 = vunpack.c.l.b16 %v379
        %v451 = vunpack.c.l.b16 %v380
        %v452 = vunpack.c.l.b16 %v381
        %v453 = vunpack.c.l.b16 %v382
        %v454 = vunpack.c.l.b16 %v383
        %v455 = vunpack.c.l.b16 %v384
        %v456 = vpack.c.b16 %v425, %v424
        %v457 = vpack.c.b16 %v427, %v426
        %v458 = vpack.c.b16 %v429, %v428
        %v459 = vpack.c.b16 %v431, %v430
        %v460 = vpack.c.b16 %v433, %v432
        %v461 = vpack.c.b16 %v435, %v434
        %v462 = vpack.c.b16 %v437, %v436
        %v463 = vpack.c.b16 %v439, %v438
        %v464 = vpack.c.b16 %v441, %v440
        %v465 = vpack.c.b16 %v443, %v442
        %v466 = vpack.c.b16 %v445, %v444
        %v467 = vpack.c.b16 %v447, %v446
        %v468 = vpack.c.b16 %v449, %v448
        %v469 = vpack.c.b16 %v451, %v450
        %v470 = vpack.c.b16 %v453, %v452
        %v471 = vpack.c.b16 %v455, %v454
        %488 = vmatprep.subr.bf16.mxu0 0
        %489 = vmatpush1.bf16.msra.mxu0 %v456
        %490 = vmatprep.subr.bf16.mxu0 0
        %491 = vmatpush1.bf16.msra.mxu0 %v457
        %492 = vmatprep.subr.bf16.mxu0 0
        %493 = vmatpush1.bf16.msra.mxu0 %v458
        %494 = vmatprep.subr.bf16.mxu0 0
        %495 = vmatpush1.bf16.msra.mxu0 %v459
        %496 = vmatprep.subr.bf16.mxu0 0
        %497 = vmatpush1.bf16.msra.mxu0 %v460
        %498 = vmatprep.subr.bf16.mxu0 0
        %499 = vmatpush1.bf16.msra.mxu0 %v461
        %500 = vmatprep.subr.bf16.mxu0 0
        %501 = vmatpush1.bf16.msra.mxu0 %v462
        %502 = vmatprep.subr.bf16.mxu0 0
        %503 = vmatpush1.bf16.msra.mxu0 %v463
        %504 = vmatprep.subr.bf16.mxu0 0
        %505 = vmatpush1.bf16.msra.mxu0 %v464
        %506 = vmatprep.subr.bf16.mxu0 0
        %507 = vmatpush1.bf16.msra.mxu0 %v465
        %508 = vmatprep.subr.bf16.mxu0 0
        %509 = vmatpush1.bf16.msra.mxu0 %v466
        %510 = vmatprep.subr.bf16.mxu0 0
        %511 = vmatpush1.bf16.msra.mxu0 %v467
        %512 = vmatprep.subr.bf16.mxu0 0
        %513 = vmatpush1.bf16.msra.mxu0 %v468
        %514 = vmatprep.subr.bf16.mxu0 0
        %515 = vmatpush1.bf16.msra.mxu0 %v469
        %516 = vmatprep.subr.bf16.mxu0 0
        %517 = vmatpush1.bf16.msra.mxu0 %v470
        %518 = vmatprep.subr.bf16.mxu0 0
        %519 = vmatpush1.bf16.msra.mxu0 %v471
        %520 = vmatprep.mubr.bf16.mxu0 %v346
        %521 = vmatmul.mubr.bf16.gmra.mrb[0].mxu0 %v345
        %v522 = vpop.f32.mrb[0].mxu0
        %v523 = vadd.f32 %v390, %v522
        %v524 = vpop.f32.mrb[0].mxu0
        %v525 = vpop.f32.mrb[0].mxu0
        %v526 = vadd.f32 %v390, %v525
        %v527 = vpop.f32.mrb[0].mxu0
        %528 = vmatprep.mubr.bf16.mxu0 %v348
        %529 = vmatmul.mubr.bf16.gmra.mrb[0].mxu0 %v347
        %v530 = vpop.f32.mrb[0].mxu0
        %v531 = vadd.f32 %v390, %v530
        %v532 = vpop.f32.mrb[0].mxu0
        %v533 = vpop.f32.mrb[0].mxu0
        %v534 = vadd.f32 %v390, %v533
        %v535 = vpop.f32.mrb[0].mxu0
        %536 = vmatprep.mubr.bf16.mxu0 %v350
        %537 = vmatmul.mubr.bf16.gmra.mrb[0].mxu0 %v349
        %v538 = vpop.f32.mrb[0].mxu0
        %v539 = vadd.f32 %v390, %v538
        %v540 = vpop.f32.mrb[0].mxu0
        %v541 = vpop.f32.mrb[0].mxu0
        %v542 = vadd.f32 %v390, %v541
        %v543 = vpop.f32.mrb[0].mxu0
        %544 = vmatprep.mubr.bf16.mxu0 %v352
        %545 = vmatmul.mubr.bf16.gmra.mrb[0].mxu0 %v351
        %v546 = vpop.f32.mrb[0].mxu0
        %v547 = vadd.f32 %v390, %v546
        %v548 = vpop.f32.mrb[0].mxu0
        %v549 = vpop.f32.mrb[0].mxu0
        %v550 = vpop.f32.mrb[0].mxu0
        %551 = vdwg.mxu0
        %v552 = vmax.f32 %v523, 0.0
        %v553 = vmax.f32 %v526, 0.0
        %v554 = vmax.f32 %v531, 0.0
        %v555 = vmax.f32 %v534, 0.0
        %v556 = vmax.f32 %v539, 0.0
        %v557 = vmax.f32 %v542, 0.0
        %v558 = vmax.f32 %v547, 0.0
        %559 = vst [vmem:[%s307] sm:$0xff] %v552
        %560 = vst [vmem:[%s307 + $0x8] sm:$0xff] %v553
        %561 = vst [vmem:[%s307 + $0x10] sm:$0xff] %v554
        %562 = vst [vmem:[%s307 + $0x18] sm:$0xff] %v555
        %563 = vst [vmem:[%s307 + $0x20] sm:$0xff] %v556
        %564 = vst [vmem:[%s307 + $0x28] sm:$0xff] %v557
        %565 = vst [vmem:[%s307 + $0x30] sm:$0xff] %v558
        %v566 = vpack.c.bf16 %v553, %v552
        %v567 = vpack.c.bf16 %v555, %v554
        %v568 = vpack.c.bf16 %v557, %v556
        %v569 = vpack.c.bf16 %v558, %v558
        %v570 = vld [vmem:[#allocation7] sm:$0xf]
        %v571 = vld [vmem:[#allocation7 + $0x4] sm:$0xf]
        %v572 = vld [vmem:[#allocation7 + $0x8] sm:$0xf]
        %v573 = vld [vmem:[#allocation7 + $0xc] sm:$0xf]
        %v574 = vld [vmem:[#allocation7 + $0x10] sm:$0xf]
        %v575 = vld [vmem:[#allocation7 + $0x14] sm:$0xf]
        %v576 = vld [vmem:[#allocation7 + $0x18] sm:$0xf]
        %v577 = vld [vmem:[#allocation7 + $0x1c] sm:$0xf]
        %v578 = vld [vmem:[#allocation7 + $0x20] sm:$0xf]
        %v579 = vld [vmem:[#allocation7 + $0x24] sm:$0xf]
        %v580 = vld [vmem:[#allocation7 + $0x28] sm:$0xf]
        %v581 = vld [vmem:[#allocation7 + $0x2c] sm:$0xf]
        %v582 = vld [vmem:[#allocation7 + $0x30] sm:$0xf]
        %v583 = vld [vmem:[#allocation7 + $0x34] sm:$0xf]
        %v584 = vld [vmem:[#allocation7 + $0x38] sm:$0xf]
        %v585 = vld [vmem:[#allocation7 + $0x3c] sm:$0xf]
        %v586 = vld [vmem:[%s4] sm:$0x1]
        %v588 = vlaneseq
        %v589 = vshrl.u32 %v588, 7
        %v590 = vsub.s32 0, %v589
        %v591 = vrot.slane %v586, %v590
        %v609 = vunpack.c.l.b16 %v570
        %v610 = vunpack.c.l.b16 %v571
        %v611 = vunpack.c.l.b16 %v572
        %v612 = vunpack.c.l.b16 %v573
        %v613 = vunpack.c.l.b16 %v574
        %v614 = vunpack.c.l.b16 %v575
        %v615 = vunpack.c.l.b16 %v576
        %v616 = vunpack.c.l.b16 %v577
        %v617 = vunpack.c.l.b16 %v578
        %v618 = vunpack.c.l.b16 %v579
        %v619 = vunpack.c.l.b16 %v580
        %v620 = vunpack.c.l.b16 %v581
        %v621 = vunpack.c.l.b16 %v582
        %v622 = vunpack.c.l.b16 %v583
        %v623 = vunpack.c.l.b16 %v584
        %v624 = vunpack.c.l.b16 %v585
        %v625 = vpack.c.b16 %v610, %v609
        %v626 = vpack.c.b16 %v612, %v611
        %v627 = vpack.c.b16 %v614, %v613
        %v628 = vpack.c.b16 %v616, %v615
        %v629 = vpack.c.b16 %v618, %v617
        %v630 = vpack.c.b16 %v620, %v619
        %v631 = vpack.c.b16 %v622, %v621
        %v632 = vpack.c.b16 %v624, %v623
        %641 = vmatprep.subr.bf16.mxu0 0
        %642 = vmatpush1.bf16.msra.mxu0 %v625
        %643 = vmatprep.subr.bf16.mxu0 0
        %644 = vmatpush1.bf16.msra.mxu0 %v626
        %645 = vmatprep.subr.bf16.mxu0 0
        %646 = vmatpush1.bf16.msra.mxu0 %v627
        %647 = vmatprep.subr.bf16.mxu0 0
        %648 = vmatpush1.bf16.msra.mxu0 %v628
        %649 = vmatprep.subr.bf16.mxu0 0
        %650 = vmatpush1.bf16.msra.mxu0 %v629
        %651 = vmatprep.subr.bf16.mxu0 0
        %652 = vmatpush1.bf16.msra.mxu0 %v630
        %653 = vmatprep.subr.bf16.mxu0 0
        %654 = vmatpush1.bf16.msra.mxu0 %v631
        %655 = vmatprep.subr.bf16.mxu0 0
        %656 = vmatpush1.bf16.msra.mxu0 %v632
        %657 = vmatprep.subr.bf16.mxu0 0
        %658 = vmatpush1.bf16.msra.mxu0 0
        %659 = vmatprep.subr.bf16.mxu0 0
        %660 = vmatpush1.bf16.msra.mxu0 0
        %661 = vmatprep.subr.bf16.mxu0 0
        %662 = vmatpush1.bf16.msra.mxu0 0
        %663 = vmatprep.subr.bf16.mxu0 0
        %664 = vmatpush1.bf16.msra.mxu0 0
        %665 = vmatprep.subr.bf16.mxu0 0
        %666 = vmatpush1.bf16.msra.mxu0 0
        %667 = vmatprep.subr.bf16.mxu0 0
        %668 = vmatpush1.bf16.msra.mxu0 0
        %669 = vmatprep.subr.bf16.mxu0 0
        %670 = vmatpush1.bf16.msra.mxu0 0
        %671 = vmatprep.subr.bf16.mxu0 0
        %672 = vmatpush1.bf16.msra.mxu0 0
        %673 = vmatprep.mubr.bf16.mxu0 0
        %674 = vmatmul.mubr.bf16.gmra.mrb[0].mxu0 %v566
        %v675 = vpop.f32.mrb[0].mxu0
        %v676 = vadd.f32 %v591, %v675
        %v677 = vpop.f32.mrb[0].mxu0
        %v678 = vpop.f32.mrb[0].mxu0
        %v679 = vadd.f32 %v591, %v678
        %v680 = vpop.f32.mrb[0].mxu0
        %681 = vmatprep.mubr.bf16.mxu0 0
        %682 = vmatmul.mubr.bf16.gmra.mrb[0].mxu0 %v567
        %v683 = vpop.f32.mrb[0].mxu0
        %v684 = vadd.f32 %v591, %v683
        %v685 = vpop.f32.mrb[0].mxu0
        %v686 = vpop.f32.mrb[0].mxu0
        %v687 = vadd.f32 %v591, %v686
        %v688 = vpop.f32.mrb[0].mxu0
        %689 = vmatprep.mubr.bf16.mxu0 0
        %690 = vmatmul.mubr.bf16.gmra.mrb[0].mxu0 %v568
        %v691 = vpop.f32.mrb[0].mxu0
        %v692 = vadd.f32 %v591, %v691
        %v693 = vpop.f32.mrb[0].mxu0
        %v694 = vpop.f32.mrb[0].mxu0
        %v695 = vadd.f32 %v591, %v694
        %v696 = vpop.f32.mrb[0].mxu0
        %697 = vmatprep.mubr.bf16.mxu0 0
        %698 = vmatmul.mubr.bf16.gmra.mrb[0].mxu0 %v569
        %v699 = vpop.f32.mrb[0].mxu0
        %v700 = vadd.f32 %v591, %v699
        %v701 = vpop.f32.mrb[0].mxu0
        %v702 = vpop.f32.mrb[0].mxu0
        %v703 = vpop.f32.mrb[0].mxu0
        %704 = vdwg.mxu0
        %v705 = vmul.f32 %v676, %v676
        %v706 = vmul.f32 %v679, %v679
        %v707 = vmul.f32 %v684, %v684
        %v708 = vmul.f32 %v687, %v687
        %v709 = vmul.f32 %v692, %v692
        %v710 = vmul.f32 %v695, %v695
        %v711 = vmul.f32 %v700, %v700
        %712 = vadd.xlane.f32.xlu0 %v705
        %v713 = vpop.xlane.xlu0 %712
        %714 = vadd.xlane.f32.xlu0 %v706
        %v715 = vpop.xlane.xlu0 %714
        %716 = vadd.xlane.f32.xlu0 %v707
        %v717 = vpop.xlane.xlu0 %716
        %718 = vadd.xlane.f32.xlu0 %v708
        %v719 = vpop.xlane.xlu0 %718
        %720 = vadd.xlane.f32.xlu0 %v709
        %v721 = vpop.xlane.xlu0 %720
        %722 = vadd.xlane.f32.xlu0 %v710
        %v723 = vpop.xlane.xlu0 %722
        %724 = vadd.xlane.f32.xlu0 %v711
        %v725 = vpop.xlane.xlu0 %724
        %v726 = vmax.f32 %v713, 1e-24
        %v727 = vmax.f32 %v715, 1e-24
        %v728 = vmax.f32 %v717, 1e-24
        %v729 = vmax.f32 %v719, 1e-24
        %v730 = vmax.f32 %v721, 1e-24
        %v731 = vmax.f32 %v723, 1e-24
        %v732 = vmax.f32 %v725, 1e-24
        %v733 = vrsqrt.pop %v726
        %v734 = vrsqrt.pop %v727
        %v735 = vrsqrt.pop %v728
        %v736 = vrsqrt.pop %v729
        %v737 = vrsqrt.pop %v730
        %v738 = vrsqrt.pop %v731
        %v739 = vrsqrt.pop %v732
        %v740 = vmul.f32 %v676, %v733
        %v741 = vmul.f32 %v679, %v734
        %v742 = vmul.f32 %v684, %v735
        %v743 = vmul.f32 %v687, %v736
        %v744 = vmul.f32 %v692, %v737
        %v745 = vmul.f32 %v695, %v738
        %v746 = vmul.f32 %v700, %v739
        %747 = vst [vmem:[%s313] sm:$0xff] %v740
        %748 = vst [vmem:[%s313 + $0x8] sm:$0xff] %v741
        %749 = vst [vmem:[%s313 + $0x10] sm:$0xff] %v742
        %750 = vst [vmem:[%s313 + $0x18] sm:$0xff] %v743
        %751 = vst [vmem:[%s313 + $0x20] sm:$0xff] %v744
        %752 = vst [vmem:[%s313 + $0x28] sm:$0xff] %v745
        %753 = vst [vmem:[%s313 + $0x30] sm:$0xff] %v746
        %s754 = sand.u32 %s143, 1
        %s755 = scalar_lea.sflag [#allocation4], %s754
        %s756 = sand.u32 %s143, 1
        %s757 = smul.addr %s756, 56
        %s758 = scalar_lea.vmem [#allocation8], %s757
        %s759 = sand.u32 %s169, 1
        %s760 = sand.u32 %s169, 1
        %s761 = smul.addr %s760, 56
        %s762 = scalar_lea.vmem [#allocation9], %s761
        // Predicated region
        $region53: #{embedding_net_forward.1} parent=39 // pred_check
          %p763 = pneg %p153
        $region54: #{embedding_net_forward.1} parent=39 // pred_check_branch
          %765 = sbr.rel (%p763) target = $region56
        $region55: #{embedding_net_forward.1} parent=39 // pred_region
          %s766 = smul.u32 7, %s25
          %s767 = ssub.s32 13, %s766
          %p768 = scmp.lt.s32.totalorder %s767, 7
          %s769 = scalar_select %p768, %s767, 7
          %s770 = smul.u32 128, %s769
          %s772 = ssub.s32 896, %s770
          %773 = vsyncadd %s755, %s772
          %p774 = scmp.ne.s32.totalorder 0, %s770
          %s775 = smul.addr %s766, 128
          %s776 = scalar_lea.hbm %s5, %s775
          %s777 = smul.u32 8, %s769
          %s778 = sshll.u32 %s758, 4
          %s779 = int_to_ptr.vmem [resolvable:$true] %s778
          %s780 = sshll.u32 %s777, 4
          %784 = dma.vmem_to_hbm [thread:$0]  (%p774), %s779, %s780, %s776, %s755, 128, 128, 8
        $region56: #{embedding_net_forward.1} parent=39 // pred_fallthru
          _
        // Predicated region
        $region57: #{embedding_net_forward.1} parent=39 // pred_check
          %p785 = pneg %p179
        $region58: #{embedding_net_forward.1} parent=39 // pred_check_branch
          %787 = sbr.rel (%p785) target = $region60
        $region59: #{embedding_net_forward.1} parent=39 // pred_region
          %s788 = smul.u32 7, %s25
          %s789 = ssub.s32 13, %s788
          %p790 = scmp.lt.s32.totalorder %s789, 7
          %s791 = scalar_select %p790, %s789, 7
          %s792 = smul.u32 128, %s791
          %p793 = scmp.ne.s32.totalorder 0, %s792
          %s794 = smul.addr %s788, 8
          %s795 = scalar_lea.vmem %s6, %s794
          // Predicated region
          $region61: #{embedding_net_forward.1} parent=59 // pred_check
            %p796 = pneg %p793
          $region62: #{embedding_net_forward.1} parent=59 // pred_check_branch
            %798 = sbr.rel (%p796) target = $region64
          $region63: #{embedding_net_forward.1} parent=59 // pred_region
            // Predicated region
            $region65: #{embedding_net_forward.1} parent=63 // pred_check
              _
            $region66: #{embedding_net_forward.1} parent=63 // pred_check_branch
              %800 = sbr.rel (0) target = $region68
            $region67: #{embedding_net_forward.1} parent=63 // pred_region
              // Predicated region
              $region87: #{embedding_net_forward.1} parent=67 // pred_check
                _
              $region88: #{embedding_net_forward.1} parent=67 // pred_check_branch
                %862 = sbr.rel (0) target = $region90
              $region89: #{embedding_net_forward.1} parent=67 // pred_region
                %s863 = sdiv.u32.pop %s791, 7
                %s864 = srem.u32.pop %s791, 7
                // While loop
                $region91: #{embedding_net_forward.1} parent=89 // loop_pre_header
                  _
                $region92: #{embedding_net_forward.1} parent=89 // loop_header
                  %s866 = sphi 0, %s868
                  %p867 = scmp.ge.s32.totalorder %s866, %s863
                  %s871 = sphi 0, %s890
                  %s872 = sphi %s762, %s893
                  %s873 = sphi %s795, %s894
                $region93: #{embedding_net_forward.1} parent=89 // loop_header_branch
                  %870 = sbr.rel (%p867) target = $region97
                $region94: #{embedding_net_forward.1} parent=89 // loop_body
                  %v874 = vld [vmem:[%s872] sm:$0xff]
                  %875 = vst [vmem:[%s873] sm:$0xff] %v874
                  %v876 = vld [vmem:[%s872 + $0x8] sm:$0xff]
                  %877 = vst [vmem:[%s873 + $0x8] sm:$0xff] %v876
                  %v878 = vld [vmem:[%s872 + $0x10] sm:$0xff]
                  %879 = vst [vmem:[%s873 + $0x10] sm:$0xff] %v878
                  %v880 = vld [vmem:[%s872 + $0x18] sm:$0xff]
                  %881 = vst [vmem:[%s873 + $0x18] sm:$0xff] %v880
                  %v882 = vld [vmem:[%s872 + $0x20] sm:$0xff]
                  %883 = vst [vmem:[%s873 + $0x20] sm:$0xff] %v882
                  %v884 = vld [vmem:[%s872 + $0x28] sm:$0xff]
                  %885 = vst [vmem:[%s873 + $0x28] sm:$0xff] %v884
                  %v886 = vld [vmem:[%s872 + $0x30] sm:$0xff]
                  %887 = vst [vmem:[%s873 + $0x30] sm:$0xff] %v886
                  %s888 = sadd.s32 1, %s871
                  %p889 = scmp.ge.s32.totalorder %s888, %s863
                  %s890 = scalar_select %p889, 0, %s888
                  %s891 = smul.u32 %s890, 56
                  %s892 = smul.u32 %s890, 56
                  %s893 = scalar_lea.vmem %s762, %s891 [#allocation9]
                  %s894 = scalar_lea.vmem %s795, %s892
                $region95: #{embedding_net_forward.1} parent=89 // loop_footer
                  %s868 = sadd.s32 %s866, 1
                $region96: #{embedding_net_forward.1} parent=89 // loop_footer_branch
                  %865 = sbr.rel target = $region92
                $region97: #{embedding_net_forward.1} parent=89 // loop_exit
                  _
                %s895 = sdiv.u32.pop %s791, 7
                %s896 = srem.u32.pop %s791, 7
                %s897 = smul.u32 %s895, 7
                %s898 = smul.u32 8, %s897
                %s899 = scalar_lea.vmem %s762, %s898 [#allocation9]
                %s900 = smul.u32 8, %s897
                %s901 = scalar_lea.vmem %s795, %s900
                // While loop
                $region98: #{embedding_net_forward.1} parent=89 // loop_pre_header
                  _
                $region99: #{embedding_net_forward.1} parent=89 // loop_header
                  %s903 = sphi 0, %s905
                  %p904 = scmp.ge.s32.totalorder %s903, %s896
                  %s908 = sphi 0, %s915
                  %s909 = sphi %s899, %s918
                  %s910 = sphi %s901, %s919
                $region100: #{embedding_net_forward.1} parent=89 // loop_header_branch
                  %907 = sbr.rel (%p904) target = $region104
                $region101: #{embedding_net_forward.1} parent=89 // loop_body
                  %v911 = vld [vmem:[%s909] sm:$0xff]
                  %912 = vst [vmem:[%s910] sm:$0xff] %v911
                  %s913 = sadd.s32 1, %s908
                  %p914 = scmp.ge.s32.totalorder %s913, %s896
                  %s915 = scalar_select %p914, 0, %s913
                  %s916 = smul.u32 %s915, 8
                  %s917 = smul.u32 %s915, 8
                  %s918 = scalar_lea.vmem %s899, %s916 [#allocation9]
                  %s919 = scalar_lea.vmem %s901, %s917
                $region102: #{embedding_net_forward.1} parent=89 // loop_footer
                  %s905 = sadd.s32 %s903, 1
                $region103: #{embedding_net_forward.1} parent=89 // loop_footer_branch
                  %902 = sbr.rel target = $region99
                $region104: #{embedding_net_forward.1} parent=89 // loop_exit
                  _
              $region90: #{embedding_net_forward.1} parent=67 // pred_fallthru
                _
              // Predicated region
              $region105: #{embedding_net_forward.1} parent=67 // pred_check
                _
              $region106: #{embedding_net_forward.1} parent=67 // pred_check_branch
                %921 = sbr.rel target = $region108
              $region107: #{embedding_net_forward.1} parent=67 // pred_region
                _
              $region108: #{embedding_net_forward.1} parent=67 // pred_fallthru
                _
            $region68: #{embedding_net_forward.1} parent=63 // pred_fallthru
              _
            // Predicated region
            $region69: #{embedding_net_forward.1} parent=63 // pred_check
              _
            $region70: #{embedding_net_forward.1} parent=63 // pred_check_branch
              %802 = sbr.rel target = $region72
            $region71: #{embedding_net_forward.1} parent=63 // pred_region
              %s804 = sdiv.u32.pop %s791, 7
              %s805 = srem.u32.pop %s791, 7
              // While loop
              $region73: #{embedding_net_forward.1} parent=71 // loop_pre_header
                _
              $region74: #{embedding_net_forward.1} parent=71 // loop_header
                %s807 = sphi 0, %s809
                %p808 = scmp.ge.s32.totalorder %s807, %s804
                %s812 = sphi 0, %s831
                %s813 = sphi %s762, %s834
                %s814 = sphi %s795, %s835
              $region75: #{embedding_net_forward.1} parent=71 // loop_header_branch
                %811 = sbr.rel (%p808) target = $region79
              $region76: #{embedding_net_forward.1} parent=71 // loop_body
                %v815 = vld [vmem:[%s813] sm:$0xff]
                %816 = vst [vmem:[%s814] sm:$0xff] %v815
                %v817 = vld [vmem:[%s813 + $0x8] sm:$0xff]
                %818 = vst [vmem:[%s814 + $0x8] sm:$0xff] %v817
                %v819 = vld [vmem:[%s813 + $0x10] sm:$0xff]
                %820 = vst [vmem:[%s814 + $0x10] sm:$0xff] %v819
                %v821 = vld [vmem:[%s813 + $0x18] sm:$0xff]
                %822 = vst [vmem:[%s814 + $0x18] sm:$0xff] %v821
                %v823 = vld [vmem:[%s813 + $0x20] sm:$0xff]
                %824 = vst [vmem:[%s814 + $0x20] sm:$0xff] %v823
                %v825 = vld [vmem:[%s813 + $0x28] sm:$0xff]
                %826 = vst [vmem:[%s814 + $0x28] sm:$0xff] %v825
                %v827 = vld [vmem:[%s813 + $0x30] sm:$0xff]
                %828 = vst [vmem:[%s814 + $0x30] sm:$0xff] %v827
                %s829 = sadd.s32 1, %s812
                %p830 = scmp.ge.s32.totalorder %s829, %s804
                %s831 = scalar_select %p830, 0, %s829
                %s832 = smul.u32 %s831, 56
                %s833 = smul.u32 %s831, 56
                %s834 = scalar_lea.vmem %s762, %s832 [#allocation9]
                %s835 = scalar_lea.vmem %s795, %s833
              $region77: #{embedding_net_forward.1} parent=71 // loop_footer
                %s809 = sadd.s32 %s807, 1
              $region78: #{embedding_net_forward.1} parent=71 // loop_footer_branch
                %806 = sbr.rel target = $region74
              $region79: #{embedding_net_forward.1} parent=71 // loop_exit
                _
              %s836 = sdiv.u32.pop %s791, 7
              %s837 = srem.u32.pop %s791, 7
              %s838 = smul.u32 %s836, 7
              %s839 = smul.u32 8, %s838
              %s840 = scalar_lea.vmem %s762, %s839 [#allocation9]
              %s841 = smul.u32 8, %s838
              %s842 = scalar_lea.vmem %s795, %s841
              // While loop
              $region80: #{embedding_net_forward.1} parent=71 // loop_pre_header
                _
              $region81: #{embedding_net_forward.1} parent=71 // loop_header
                %s844 = sphi 0, %s846
                %p845 = scmp.ge.s32.totalorder %s844, %s837
                %s849 = sphi 0, %s856
                %s850 = sphi %s840, %s859
                %s851 = sphi %s842, %s860
              $region82: #{embedding_net_forward.1} parent=71 // loop_header_branch
                %848 = sbr.rel (%p845) target = $region86
              $region83: #{embedding_net_forward.1} parent=71 // loop_body
                %v852 = vld [vmem:[%s850] sm:$0xff]
                %853 = vst [vmem:[%s851] sm:$0xff] %v852
                %s854 = sadd.s32 1, %s849
                %p855 = scmp.ge.s32.totalorder %s854, %s837
                %s856 = scalar_select %p855, 0, %s854
                %s857 = smul.u32 %s856, 8
                %s858 = smul.u32 %s856, 8
                %s859 = scalar_lea.vmem %s840, %s857 [#allocation9]
                %s860 = scalar_lea.vmem %s842, %s858
              $region84: #{embedding_net_forward.1} parent=71 // loop_footer
                %s846 = sadd.s32 %s844, 1
              $region85: #{embedding_net_forward.1} parent=71 // loop_footer_branch
                %843 = sbr.rel target = $region81
              $region86: #{embedding_net_forward.1} parent=71 // loop_exit
                _
            $region72: #{embedding_net_forward.1} parent=63 // pred_fallthru
              _
          $region64: #{embedding_net_forward.1} parent=59 // pred_fallthru
            _
          %922 = vnop
        $region60: #{embedding_net_forward.1} parent=39 // pred_fallthru
          _
      $region40: #{embedding_net_forward.1} parent=5 // pred_fallthru
        _
      %p923 = scmp.le.s32.totalorder 2, %s20
      // Predicated region
      $region109: #{embedding_net_forward.1} parent=5 // pred_check
        %p924 = pneg %p923
      $region110: #{embedding_net_forward.1} parent=5 // pred_check_branch
        %926 = sbr.rel (%p924) target = $region112
      $region111: #{embedding_net_forward.1} parent=5 // pred_region
        %s927 = ssub.s32 %s20, 2
        // Predicated region
        $region113: #{embedding_net_forward.1} parent=111 // pred_check
          %p928 = pneg %p159
        $region114: #{embedding_net_forward.1} parent=111 // pred_check_branch
          %930 = sbr.rel (%p928) target = $region116
        $region115: #{embedding_net_forward.1} parent=111 // pred_region
          %s931 = sand.u32 %s144, 1
          %s932 = scalar_lea.sflag [#allocation4], %s931
          %s933 = sand.u32 %s144, 1
          %s934 = smul.addr %s933, 56
          %s935 = scalar_lea.vmem [#allocation8], %s934
          %936 = dma.done %s932, 896
        $region116: #{embedding_net_forward.1} parent=111 // pred_fallthru
          _
        // Predicated region
        $region117: #{embedding_net_forward.1} parent=111 // pred_check
          %p937 = pneg %p185
        $region118: #{embedding_net_forward.1} parent=111 // pred_check_branch
          %939 = sbr.rel (%p937) target = $region120
        $region119: #{embedding_net_forward.1} parent=111 // pred_region
          %s940 = sand.u32 %s170, 1
          %s941 = sand.u32 %s170, 1
          %s942 = smul.addr %s941, 56
          %s943 = scalar_lea.vmem [#allocation9], %s942
        $region120: #{embedding_net_forward.1} parent=111 // pred_fallthru
          _
      $region112: #{embedding_net_forward.1} parent=5 // pred_fallthru
        _
    $region6: #{embedding_net_forward.1} parent=1 // loop_footer
      %s24 = sadd.s32 1, %s20
    $region7: #{embedding_net_forward.1} parent=1 // loop_footer_branch
      %19 = sbr.rel target = $region3
    $region8: #{embedding_net_forward.1} parent=1 // loop_exit
      _
    %944 = vsyncpa [#allocation3], 1
    %s945 = scalar_lea.sflag [#allocation3], 1
    %946 = vsyncpa %s945, 1
    %947 = vsyncpa [#allocation6], 1
    %948 = vsyncpa [#allocation4], 1
    %s949 = scalar_lea.sflag [#allocation4], 1
    %950 = vsyncpa %s949, 1

</llo_original>
